<compile_context>
chip_gen: v7x
topology: tpu7x:2x2x1
jax: 0.10.0
libtpu: 0.0.40
codegen_flags: <defaults>
</compile_context>

<pallas_src>
import jax
import jax.numpy as jnp
from jax.experimental import pallas as pl
from jax.experimental.pallas import tpu as pltpu


_SELU_ALPHA = 1.6732632423543772848170429916717
_SELU_SCALE = 1.0507009873554804934193349852946


def _apply_activation(x, activation: str):
    """Elementwise activation matching the PyTorch module's semantics."""
    if activation == "relu":
        return jnp.maximum(x, 0.0)
    if activation == "leaky_relu":
        return jnp.where(x >= 0, x, x * 0.01)
    if activation == "selu":
        # expm1 (not exp(x)-1): full precision near 0, same EUP cost, and
        # matches jax.nn.selu / torch.nn.functional.selu exactly.
        return _SELU_SCALE * jnp.where(x > 0, x, _SELU_ALPHA * jnp.expm1(x))
    if activation == "none":
        return x
    raise ValueError(f"unknown activation: {activation}")


def _make_activation_kernel(activation: str):
    def kernel(x_ref, o_ref):
        # exp/expm1 -> EUP slot; max/where -> VPU slot. Both have huge slack
        # under the streaming DMA, so no compute micro-opt is needed.
        o_ref[...] = _apply_activation(x_ref[...], activation).astype(o_ref.dtype)

    return kernel


def _block_policy():
    """Generation-aware (via VMEM capacity) target block bytes + capacity."""
    try:
        cap = int(pltpu.get_tpu_info().vmem_capacity_bytes)
    except Exception:  # hardware query unavailable -> conservative defaults
        cap = 0
    if cap and cap <= (96 << 20):
        # v7x-class part: 64 MiB VMEM/TC, ~3.2 TB/s HBM -> large blocks to
        # amortize per-grid-step overhead (2 MiB blocks would cost 10-15%).
        return (8 << 20), cap
    # v5e / v6e (128 MiB VMEM) or unknown: 4 MiB blocks (>=86% of roofline).
    return (4 << 20), cap


def _choose_tile_rows(rows: int, bytes_per_row: int, block_bytes: int, g: int):
    """Pick a sublane-aligned tile height; prefer >=2 balanced, exact blocks."""
    if rows < 2 * g:
        # Too small to split on sublane-aligned boundaries: one full block
        # (a full-extent dim is always a legal block dim).
        return rows

    # At least 2 blocks so the "parallel" grid really shards across both v7x
    # TensorCores; round the block count up to even for 2-TC balance.
    n_blocks = max(2, pl.cdiv(rows * bytes_per_row, block_bytes))
    if n_blocks % 2:
        n_blocks += 1
    tile_rows = pl.cdiv(pl.cdiv(rows, n_blocks), g) * g

    # Prefer a tile that divides rows exactly (no ragged/masked last block);
    # among nearby candidates also prefer an even block count.
    if rows % tile_rows != 0:
        best = None
        cand = tile_rows - g
        lo = max(g, tile_rows - 4 * g)
        while cand >= lo:
            if rows % cand == 0:
                if (rows // cand) % 2 == 0:
                    best = cand
                    break
                if best is None:
                    best = cand
            cand -= g
        if best is not None:
            tile_rows = best

    return min(tile_rows, rows)


def residual_block_forward(
    x,
    activation: str = "relu",
    *,
    target_block_bytes: int | None = None,
    force_kernel: bool = False,
):
    """ResidualBlock.forward(x) == activation(x). Any shape, any float dtype."""
    orig_shape = x.shape
    orig_dtype = x.dtype

    # Identity activation: no compute, no HBM traffic.
    if activation == "none":
        return x

    total = 1
    for d in orig_shape:
        total *= d
    if total == 0:
        return x

    itemsize = int(jnp.dtype(orig_dtype).itemsize)

    # Tiny inputs: pallas_call launch + reshape overhead dominates; fused XLA
    # elementwise is already at roofline and fuses with surrounding ops.
    if not force_kernel and total * itemsize < 512 * 1024:
        return _apply_activation(x, activation).astype(orig_dtype)

    # Unaligned element counts: avoid the pad + trailing-slice round trips
    # (~2x HBM traffic); plain XLA elementwise handles these at roofline.
    if total % 128 != 0:
        return _apply_activation(x, activation).astype(orig_dtype)

    # Widest lane dim (multiple of 128) that divides total: fewer, larger DMA
    # descriptors and fully unmasked vector stores.
    lane = 128
    for cand in (1024, 512, 256, 128):
        if total % cand == 0:
            lane = cand
            break

    rows = total // lane
    x2d = x.reshape(rows, lane)  # zero-copy view of the flat buffer

    block_bytes, vmem_cap = _block_policy()
    if target_block_bytes is not None:
        block_bytes = int(target_block_bytes)

    # Dtype-aware sublane packing granularity: 8 rows for 32-bit, 16 for
    # 16-bit, 32 for 8-bit, so packed-sublane tiles stay full / unmasked.
    g = max(8, 32 // itemsize)
    bytes_per_row = lane * itemsize

    tile_rows = _choose_tile_rows(rows, bytes_per_row, block_bytes, g)
    grid = (pl.cdiv(rows, tile_rows),)

    # Explicit VMEM budget: in + out double-buffers = 4x block, plus headroom,
    # clamped below the physical capacity (64 MiB on v7x, 128 MiB v5e/v6e).
    block_bytes_actual = tile_rows * bytes_per_row
    vmem_limit = max(24 << 20, 4 * block_bytes_actual + (8 << 20))
    if vmem_cap:
        vmem_limit = min(vmem_limit, max(16 << 20, vmem_cap - (16 << 20)))

    out2d = pl.pallas_call(
        _make_activation_kernel(activation),
        out_shape=jax.ShapeDtypeStruct((rows, lane), orig_dtype),
        grid=grid,
        in_specs=[pl.BlockSpec((tile_rows, lane), lambda i: (i, 0))],
        out_specs=pl.BlockSpec((tile_rows, lane), lambda i: (i, 0)),
        compiler_params=pltpu.CompilerParams(
            # "parallel" lets v7x shard the streaming loop over both TCs;
            # no-op on single-TC v5e/v6e.
            dimension_semantics=("parallel",),
            vmem_limit_bytes=int(vmem_limit),
        ),
    )(x2d)

    return out2d.reshape(orig_shape)


def _ref_forward(x, activation: str = "relu"):
    """Pure-JAX reference matching PyTorch semantics."""
    if activation == "relu":
        return jnp.maximum(x, 0.0)
    if activation == "leaky_relu":
        return jnp.where(x >= 0, x, x * 0.01)
    if activation == "selu":
        return jax.nn.selu(x)
    if activation == "none":
        return x
    raise ValueError(activation)


if __name__ == "__main__":
    key = jax.random.PRNGKey(0)

    # Primary test: NCHW input matching ResidualBlock(4, 4, 'relu').
    x = jax.random.normal(key, (2, 4, 16, 16), dtype=jnp.float32)
    out = jax.block_until_ready(
        residual_block_forward(x, activation="relu", force_kernel=True)
    )
    ref = _ref_forward(x, "relu")
    assert out.shape == x.shape and out.dtype == x.dtype
    assert jnp.allclose(out, ref, atol=1e-6), "relu mismatch vs reference"

    # Other activation variants ('none' short-circuits to identity).
    for act in ("leaky_relu", "selu", "none"):
        o = jax.block_until_ready(
            residual_block_forward(x, activation=act, force_kernel=True)
        )
        assert jnp.allclose(o, _ref_forward(x, act), atol=1e-6), act

    # Multi-block grid (>= 2 balanced, sublane-aligned, non-ragged blocks)
    # with a small artificial block budget so the grid loop really iterates.
    x2 = jax.random.normal(jax.random.PRNGKey(0), (2, 16, 32, 32), jnp.float32)
    o2 = jax.block_until_ready(
        residual_block_forward(
            x2, activation="leaky_relu", force_kernel=True,
            target_block_bytes=32 * 1024,
        )
    )
    assert jnp.allclose(o2, _ref_forward(x2, "leaky_relu"), atol=1e-6)

    # bf16 input: exercises the dtype-aware 16-row sublane granularity.
    x3 = jax.random.normal(jax.random.PRNGKey(0), (4, 16, 32, 32)).astype(jnp.bfloat16)
    o3 = jax.block_until_ready(
        residual_block_forward(
            x3, activation="relu", force_kernel=True,
            target_block_bytes=64 * 1024,
        )
    )
    assert o3.dtype == jnp.bfloat16
    assert jnp.allclose(
        o3.astype(jnp.float32), _ref_forward(x3, "relu").astype(jnp.float32),
        atol=1e-6,
    )

    # Default (generation-aware) block policy on a larger tensor, no force.
    x4 = jax.random.normal(jax.random.PRNGKey(0), (8, 64, 64, 64), jnp.float32)
    o4 = jax.block_until_ready(residual_block_forward(x4, activation="selu"))
    assert jnp.allclose(o4, _ref_forward(x4, "selu"), atol=1e-6)

    # Unaligned element count -> pure-XLA fallback (no pad/slice copies).
    x5 = jax.random.normal(jax.random.PRNGKey(0), (3, 5, 7, 11), jnp.float32)
    o5 = jax.block_until_ready(
        residual_block_forward(x5, activation="selu", force_kernel=True)
    )
    assert o5.shape == x5.shape
    assert jnp.allclose(o5, _ref_forward(x5, "selu"), atol=1e-6)

    # Small-input fast path (no pallas_call) must agree as well.
    o_fast = jax.block_until_ready(residual_block_forward(x, activation="relu"))
    assert jnp.allclose(o_fast, ref, atol=1e-6), "fast path mismatch"

    print("KERNEL_OK")
</pallas_src>

<mosaic_0001>
module attributes {stable_mosaic.version = 11 : i64} {
  func.func @kernel(%arg0: i32, %arg1: memref<2x1024xf32, #tpu.memory_space<vmem>>, %arg2: memref<2x1024xf32, #tpu.memory_space<vmem>>) attributes {dimension_semantics = [#tpu.dimension_semantics<parallel>], iteration_bounds = array<i64: 1>, scalar_prefetch = 0 : i64, scratch_operands = 0 : i64, tpu.core_type = #tpu.core_type<tc>, window_params = [{transform_indices = @transform_0, window_bounds = array<i64: 2, 1024>}, {transform_indices = @transform_1, window_bounds = array<i64: 2, 1024>}]} {
    %c0 = arith.constant 0 : index
    %c0_0 = arith.constant 0 : index
    %0 = vector.load %arg1[%c0, %c0_0] : memref<2x1024xf32, #tpu.memory_space<vmem>>, vector<2x1024xf32>
    %cst = arith.constant 0.000000e+00 : f32
    %1 = vector.broadcast %cst : f32 to vector<2x1024xf32>
    %2 = arith.maximumf %0, %1 : vector<2x1024xf32>
    %c0_1 = arith.constant 0 : index
    %c0_2 = arith.constant 0 : index
    %3 = vector.load %arg2[%c0_1, %c0_2] : memref<2x1024xf32, #tpu.memory_space<vmem>>, vector<2x1024xf32>
    tpu.vector_store %arg2[%c0_1, %c0_2], %2 {strides = array<i32>} : memref<2x1024xf32, #tpu.memory_space<vmem>>, vector<2x1024xf32>,
    return
  }
  func.func @transform_0(%arg0: i32) -> (i32, i32) {
    %c0_i32 = arith.constant 0 : i32
    %c0_i32_0 = arith.constant 0 : i32
    return %arg0, %c0_i32 : i32, i32
  }
  func.func @transform_1(%arg0: i32) -> (i32, i32) {
    %c0_i32 = arith.constant 0 : i32
    %c0_i32_0 = arith.constant 0 : i32
    return %arg0, %c0_i32 : i32, i32
  }
}

</mosaic_0001>

<llo_original>
// kernel: tpu_custom_call.1
$region0: #{tpu_custom_call.1}
  #allocation0 [shape = 'u32[]', space=smem, size = 0x4, offset = 0x4, fixed_abs, tag = 'smem constant byte address 0x4 - core index']
  #allocation1 [shape = 'u32[144,128]{1,0:T(1,128)}', space=vmem, size = 0x12000, scoped, tag = 'internal scratch']
  %s0 = inlined_call_operand.hbm [shape: f32[2,1024], index: 0, kind: input, shape index: {}]
  %s1 = inlined_call_operand.hbm [shape: f32[2,1024], index: 1, kind: output, shape index: {}]
  %s2 = sld [smem:[#allocation0]]
  $region18: #{tpu_custom_call.1} parent=0
    _
  %s4 = ssub.s32 1, %s2
  %s5 = scalar_select 0, %s4, %s2
  $region1: #{tpu_custom_call.1} parent=0
    #allocation2 [shape = 'u8[8192]{0}', space=vmem, size = 0x2000, scoped, tag = 'input window, operand 0, single buffered']
    #allocation3 [shape = 's32[1]{0}', space=sflag, size = 0x4, scoped, tag = 'scoped memory for tpu_custom_call.1']
    #allocation4 [shape = 's32[1]{0}', space=sflag, size = 0x4, scoped, tag = 'scoped memory for tpu_custom_call.1']
    #allocation5 [shape = 'u8[8192]{0}', space=vmem, size = 0x2000, scoped, tag = 'output window, operand 0, single buffered']
    %6 = vsyncpa [#allocation3], 0
    %7 = vsyncpa [#allocation4], 0
    // Predicated region
    $region2: #{tpu_custom_call.1} parent=1 // pred_check
      _
    $region3: #{tpu_custom_call.1} parent=1 // pred_check_branch
      %9 = sbr.rel (0) target = $region5
    $region4: #{tpu_custom_call.1} parent=1 // pred_region
      %s11 = ssub.s32 256, 256
      %12 = vsyncadd [#allocation3], %s11
      %s14 = sshll.u32 [#allocation2], 4
      %s15 = int_to_ptr.vmem [resolvable:$true] %s14
      %17 = dma.hbm_to_vmem [thread:$0]  %s0, 256, %s15, [#allocation3]
    $region5: #{tpu_custom_call.1} parent=1 // pred_fallthru
      _
    // Predicated region
    $region6: #{tpu_custom_call.1} parent=1 // pred_check
      _
    $region7: #{tpu_custom_call.1} parent=1 // pred_check_branch
      %19 = sbr.rel (0) target = $region9
    $region8: #{tpu_custom_call.1} parent=1 // pred_region
      %20 = dma.done [#allocation3], 256
    $region9: #{tpu_custom_call.1} parent=1 // pred_fallthru
      _
    %v21 = vld [vmem:[#allocation2] sm:$0xff]
    %v22 = vld [vmem:[#allocation2 + $0x8] sm:$0xff]
    %v23 = vmax.f32 %v21, 0.0
    %v24 = vmax.f32 %v22, 0.0
    %25 = vst [vmem:[#allocation5] sm:$0xff] %v23
    %26 = vst [vmem:[#allocation5 + $0x8] sm:$0xff] %v24
    // Predicated region
    $region10: #{tpu_custom_call.1} parent=1 // pred_check
      _
    $region11: #{tpu_custom_call.1} parent=1 // pred_check_branch
      %28 = sbr.rel (0) target = $region13
    $region12: #{tpu_custom_call.1} parent=1 // pred_region
      %s30 = ssub.s32 256, 256
      %31 = vsyncadd [#allocation4], %s30
      %s33 = sshll.u32 [#allocation5], 4
      %s34 = int_to_ptr.vmem [resolvable:$true] %s33
      %36 = dma.vmem_to_hbm [thread:$0]  %s34, 256, %s1, [#allocation4]
    $region13: #{tpu_custom_call.1} parent=1 // pred_fallthru
      _
    // Predicated region
    $region14: #{tpu_custom_call.1} parent=1 // pred_check
      _
    $region15: #{tpu_custom_call.1} parent=1 // pred_check_branch
      %38 = sbr.rel (0) target = $region17
    $region16: #{tpu_custom_call.1} parent=1 // pred_region
      %39 = dma.done [#allocation4], 256
    $region17: #{tpu_custom_call.1} parent=1 // pred_fallthru
      _
    %40 = vsyncpa [#allocation3], 1
    %41 = vsyncpa [#allocation4], 1

</llo_original>
